<compile_context>
chip_gen: v7x
topology: tpu7x:2x2x1
jax: 0.10.0
libtpu: 0.0.40
codegen_flags: <defaults>
</compile_context>

<pallas_src>
import functools

import jax
import jax.numpy as jnp
from jax import lax
from jax.experimental import pallas as pl
from jax.experimental.pallas import tpu as pltpu


def _round_up(x, m):
    return ((x + m - 1) // m) * m


def _vmem_capacity_bytes():
    try:
        return int(pltpu.get_tpu_info().vmem_capacity_bytes)
    except Exception:
        return 64 << 20  # conservative fallback (v7x per-TC VMEM)


def _rbf_kernel(x1_ref, x2_ref, x1n_ref, x2n_ref, o_ref, acc_ref, *,
                two_gamma, use_bf16_matmul):
    # x1_ref: (tm, tk), x2_ref: (tn, tk), x1n_ref: (tm, 1) = -gamma*||x1_i||^2,
    # x2n_ref: (1, tn) = -gamma*||x2_j||^2, o_ref: (tm, tn), acc_ref: (tm, tn).
    k = pl.program_id(2)

    @pl.when(k == 0)
    def _():
        acc_ref[...] = jnp.zeros_like(acc_ref)

    # Fold 2*gamma of the cross term into the (small) x1 tile so the
    # (tm, tn)-sized epilogue does one fewer VPU op per element.
    x1 = x1_ref[...] * two_gamma
    x2 = x2_ref[...]
    if use_bf16_matmul:
        x1 = x1.astype(jnp.bfloat16)
        x2 = x2.astype(jnp.bfloat16)

    # Cross term on the MXU, contracting the feature dim of BOTH operands
    # (no explicit transpose of x2).
    acc_ref[...] += lax.dot_general(
        x1, x2,
        dimension_numbers=(((1,), (1,)), ((), ())),
        preferred_element_type=jnp.float32,
    )

    @pl.when(k == pl.num_programs(2) - 1)
    def _():
        # acc holds 2*gamma*(x1 . x2); norms are pre-scaled by -gamma, so
        # exp_arg == -gamma * ||x1 - x2||^2 (clamped to <= 0).
        exp_arg = x1n_ref[...] + acc_ref[...] + x2n_ref[...]
        exp_arg = jnp.minimum(exp_arg, 0.0)
        o_ref[...] = jnp.exp(exp_arg).astype(o_ref.dtype)


def kernel_rbf(x1, x2, sigma=10.0, tm=512, tn=1024, use_bf16_matmul=None,
               out_dtype=jnp.float32):
    """Pallas TPU implementation of KernelRBF.forward(x1, x2)."""
    gamma = 1.0 / (2.0 * sigma ** 2)
    x1 = jnp.asarray(x1, jnp.float32)
    x2 = jnp.asarray(x2, jnp.float32)
    n1, d = x1.shape
    n2, d2 = x2.shape
    assert d == d2, "feature dims must match"

    # bf16 on the MXU only pays off when the cross term dominates (large D);
    # it relaxes ~1e-5 parity, so keep f32 for small D unless overridden.
    if use_bf16_matmul is None:
        use_bf16_matmul = d >= 1024

    # --- Tile selection (clamp to problem size, (8, 128)-friendly) -----------
    tm = max(8, min(tm, _round_up(n1, 8)))
    tn = max(128, min(tn, _round_up(n2, 128)))
    # K-tile the feature dim for large D so VMEM stays bounded independent of D.
    tk = 512 if d >= 1024 else d

    vmem_cap = _vmem_capacity_bytes()
    budget = (vmem_cap * 3) // 4  # ~48 MiB on v7x, ~96 MiB on v5e/v6e

    def footprint(tm_, tn_, tk_):
        # Double-buffered input/output blocks + resident f32 accumulator.
        dbuf = 2 * (tm_ * tk_ + tn_ * tk_ + tm_ + tn_ + tm_ * tn_)
        return 4 * (dbuf + tm_ * tn_)

    while footprint(tm, tn, tk) > budget and tn > 128:
        tn = max(128, _round_up(tn // 2, 128))
    while footprint(tm, tn, tk) > budget and tm > 8:
        tm = max(8, _round_up(tm // 2, 8))
    while footprint(tm, tn, tk) > budget and tk != d and tk > 128:
        tk = max(128, _round_up(tk // 2, 128))

    # --- Padding (zero rows/cols are harmless: zeros don't change norms or
    # dot products, and padded rows/cols are sliced out). --------------------
    n1p = _round_up(n1, tm)
    n2p = _round_up(n2, tn)
    dp = _round_up(d, tk) if tk != d else d
    if n1p != n1 or dp != d:
        x1p = jnp.pad(x1, ((0, n1p - n1), (0, dp - d)))
    else:
        x1p = x1
    if n2p != n2 or dp != d:
        x2p = jnp.pad(x2, ((0, n2p - n2), (0, dp - d)))
    else:
        x2p = x2

    # Hoisted squared row norms, pre-scaled by -gamma (computed once).
    x1n = -gamma * jnp.sum(x1p * x1p, axis=-1, keepdims=True)        # (n1p, 1)
    x2n = (-gamma * jnp.sum(x2p * x2p, axis=-1, keepdims=True)).T    # (1, n2p)

    grid = (n1p // tm, n2p // tn, dp // tk)
    vmem_limit = int(min(vmem_cap,
                         max(footprint(tm, tn, tk) + (8 << 20), 32 << 20)))

    out = pl.pallas_call(
        functools.partial(_rbf_kernel, two_gamma=2.0 * gamma,
                          use_bf16_matmul=use_bf16_matmul),
        out_shape=jax.ShapeDtypeStruct((n1p, n2p), out_dtype),
        grid_spec=pltpu.PrefetchScalarGridSpec(
            num_scalar_prefetch=0,
            grid=grid,
            in_specs=[
                pl.BlockSpec((tm, tk), lambda i, j, k: (i, k)),  # x1 tile
                pl.BlockSpec((tn, tk), lambda i, j, k: (j, k)),  # x2 tile
                pl.BlockSpec((tm, 1), lambda i, j, k: (i, 0)),   # -g*||x1||^2
                pl.BlockSpec((1, tn), lambda i, j, k: (0, j)),   # -g*||x2||^2
            ],
            out_specs=pl.BlockSpec((tm, tn), lambda i, j, k: (i, j)),
            scratch_shapes=[pltpu.VMEM((tm, tn), jnp.float32)],
        ),
        compiler_params=pltpu.CompilerParams(
            dimension_semantics=("parallel", "parallel", "arbitrary"),
            vmem_limit_bytes=vmem_limit,
        ),
    )(x1p, x2p, x1n, x2n)

    if n1p != n1 or n2p != n2:
        out = out[:n1, :n2]
    return out


def _reference(x1, x2, sigma=10.0):
    gamma = 1.0 / (2.0 * sigma ** 2)
    norm_sq = (
        jnp.sum(x1 * x1, axis=-1, keepdims=True)
        - 2.0 * x1 @ x2.T
        + jnp.sum(x2 * x2, axis=-1, keepdims=True).T
    )
    return jnp.exp(-gamma * norm_sq)


if __name__ == "__main__":
    key = jax.random.PRNGKey(0)
    k1, k2, k3, k4, k5, k6 = jax.random.split(key, 6)

    # 1) Small aligned shapes: N1=128, N2=128, D=32.
    x1 = jax.random.normal(k1, (128, 32), dtype=jnp.float32)
    x2 = jax.random.normal(k2, (128, 32), dtype=jnp.float32)
    out = jax.block_until_ready(kernel_rbf(x1, x2, sigma=10.0))
    ref = _reference(x1, x2, sigma=10.0)
    assert out.shape == (128, 128)
    assert jnp.allclose(out, ref, atol=1e-5, rtol=1e-5), "mismatch (aligned)"

    # 2) Non-divisible shapes exercise the padding / slice-out path.
    x1b = jax.random.normal(k3, (120, 32), dtype=jnp.float32)
    x2b = jax.random.normal(k4, (200, 32), dtype=jnp.float32)
    outb = jax.block_until_ready(kernel_rbf(x1b, x2b, sigma=10.0))
    refb = _reference(x1b, x2b, sigma=10.0)
    assert outb.shape == (120, 200)
    assert jnp.allclose(outb, refb, atol=1e-5, rtol=1e-5), "mismatch (padded)"

    # 3) Multi-block grid (small tiles forced) exercises accumulator re-init
    #    across (i, j) blocks.
    outc = jax.block_until_ready(kernel_rbf(x1b, x2b, sigma=10.0, tm=64, tn=128))
    assert jnp.allclose(outc, refb, atol=1e-5, rtol=1e-5), "mismatch (multiblock)"

    # 4) Large-D path exercises the K-tiled reduction (f32 matmul forced for a
    #    tight comparison against the reference).
    x1d = jax.random.normal(k5, (64, 1024), dtype=jnp.float32)
    x2d = jax.random.normal(k6, (96, 1024), dtype=jnp.float32)
    outd = jax.block_until_ready(
        kernel_rbf(x1d, x2d, sigma=10.0, use_bf16_matmul=False))
    refd = _reference(x1d, x2d, sigma=10.0)
    assert outd.shape == (64, 96)
    assert jnp.allclose(outd, refd, atol=1e-4, rtol=1e-4), "mismatch (k-tiled)"

    print("KERNEL_OK")
</pallas_src>

<mosaic_0001>
module attributes {stable_mosaic.version = 11 : i64} {
  func.func @_rbf_kernel(%arg0: i32, %arg1: i32, %arg2: i32, %arg3: memref<128x32xf32, #tpu.memory_space<vmem>>, %arg4: memref<128x32xf32, #tpu.memory_space<vmem>>, %arg5: memref<128x1xf32, #tpu.memory_space<vmem>>, %arg6: memref<1x128xf32, #tpu.memory_space<vmem>>, %arg7: memref<128x128xf32, #tpu.memory_space<vmem>>, %arg8: memref<128x128xf32, #tpu.memory_space<vmem>>) attributes {dimension_semantics = [#tpu.dimension_semantics<parallel>, #tpu.dimension_semantics<parallel>, #tpu.dimension_semantics<arbitrary>], iteration_bounds = array<i64: 1, 1, 1>, scalar_prefetch = 0 : i64, scratch_operands = 1 : i64, tpu.core_type = #tpu.core_type<tc>, window_params = [{transform_indices = @transform_0, window_bounds = array<i64: 128, 32>}, {transform_indices = @transform_1, window_bounds = array<i64: 128, 32>}, {transform_indices = @transform_2, window_bounds = array<i64: 128, 1>}, {transform_indices = @transform_3, window_bounds = array<i64: 1, 128>}, {transform_indices = @transform_4, window_bounds = array<i64: 128, 128>}]} {
    %c0_i32 = arith.constant 0 : i32
    %0 = arith.cmpi eq, %arg2, %c0_i32 : i32
    %1 = arith.extui %0 : i1 to i32
    %c0_i32_0 = arith.constant 0 : i32
    %2 = arith.cmpi ne, %1, %c0_i32_0 : i32
    scf.if %2 {
      %cst_11 = arith.constant 0.000000e+00 : f32
      %14 = vector.broadcast %cst_11 : f32 to vector<128x128xf32>
      %c0_12 = arith.constant 0 : index
      %c0_13 = arith.constant 0 : index
      %15 = vector.load %arg8[%c0_12, %c0_13] : memref<128x128xf32, #tpu.memory_space<vmem>>, vector<128x128xf32>
      tpu.vector_store %arg8[%c0_12, %c0_13], %14 {strides = array<i32>} : memref<128x128xf32, #tpu.memory_space<vmem>>, vector<128x128xf32>,
    } else {
    }
    %c0 = arith.constant 0 : index
    %c0_1 = arith.constant 0 : index
    %3 = vector.load %arg3[%c0, %c0_1] : memref<128x32xf32, #tpu.memory_space<vmem>>, vector<128x32xf32>
    %cst = arith.constant 0.00999999977 : f32
    %4 = vector.broadcast %cst : f32 to vector<128x32xf32>
    %5 = arith.mulf %3, %4 : vector<128x32xf32>
    %c0_2 = arith.constant 0 : index
    %c0_3 = arith.constant 0 : index
    %6 = vector.load %arg4[%c0_2, %c0_3] : memref<128x32xf32, #tpu.memory_space<vmem>>, vector<128x32xf32>
    %c0_4 = arith.constant 0 : index
    %c0_5 = arith.constant 0 : index
    %7 = vector.load %arg8[%c0_4, %c0_5] : memref<128x128xf32, #tpu.memory_space<vmem>>, vector<128x128xf32>
    %cst_6 = arith.constant dense<0.000000e+00> : vector<128x128xf32>
    %8 = tpu.matmul %5, %6, %cst_6 {dimension_numbers = #tpu.dot_dimension_numbers<[1], [1], [0], [0], [0, 0, 1, 0], [], []>} : vector<128x32xf32>, vector<128x32xf32>, vector<128x128xf32> -> vector<128x128xf32>
    %9 = arith.addf %7, %8 : vector<128x128xf32>
    %c0_7 = arith.constant 0 : index
    %c0_8 = arith.constant 0 : index
    %10 = vector.load %arg8[%c0_7, %c0_8] : memref<128x128xf32, #tpu.memory_space<vmem>>, vector<128x128xf32>
    tpu.vector_store %arg8[%c0_7, %c0_8], %9 {strides = array<i32>} : memref<128x128xf32, #tpu.memory_space<vmem>>, vector<128x128xf32>,
    %c0_i32_9 = arith.constant 0 : i32
    %11 = arith.cmpi eq, %arg2, %c0_i32_9 : i32
    %12 = arith.extui %11 : i1 to i32
    %c0_i32_10 = arith.constant 0 : i32
    %13 = arith.cmpi ne, %12, %c0_i32_10 : i32
    scf.if %13 {
      %c0_11 = arith.constant 0 : index
      %c0_12 = arith.constant 0 : index
      %14 = vector.load %arg5[%c0_11, %c0_12] : memref<128x1xf32, #tpu.memory_space<vmem>>, vector<128x1xf32>
      %c0_13 = arith.constant 0 : index
      %c0_14 = arith.constant 0 : index
      %15 = vector.load %arg8[%c0_13, %c0_14] : memref<128x128xf32, #tpu.memory_space<vmem>>, vector<128x128xf32>
      %16 = vector.broadcast %14 : vector<128x1xf32> to vector<128x128xf32>
      %17 = arith.addf %16, %15 : vector<128x128xf32>
      %c0_15 = arith.constant 0 : index
      %c0_16 = arith.constant 0 : index
      %18 = vector.load %arg6[%c0_15, %c0_16] : memref<1x128xf32, #tpu.memory_space<vmem>>, vector<1x128xf32>
      %19 = vector.broadcast %18 : vector<1x128xf32> to vector<128x128xf32>
      %20 = arith.addf %17, %19 : vector<128x128xf32>
      %cst_17 = arith.constant 0.000000e+00 : f32
      %21 = vector.broadcast %cst_17 : f32 to vector<128x128xf32>
      %22 = arith.minimumf %20, %21 : vector<128x128xf32>
      %23 = math.exp %22 : vector<128x128xf32>
      %c0_18 = arith.constant 0 : index
      %c0_19 = arith.constant 0 : index
      %24 = vector.load %arg7[%c0_18, %c0_19] : memref<128x128xf32, #tpu.memory_space<vmem>>, vector<128x128xf32>
      tpu.vector_store %arg7[%c0_18, %c0_19], %23 {strides = array<i32>} : memref<128x128xf32, #tpu.memory_space<vmem>>, vector<128x128xf32>,
    } else {
    }
    return
  }
  func.func @transform_0(%arg0: i32, %arg1: i32, %arg2: i32) -> (i32, i32) {
    %c0_i32 = arith.constant 0 : i32
    return %arg0, %arg2 : i32, i32
  }
  func.func @transform_1(%arg0: i32, %arg1: i32, %arg2: i32) -> (i32, i32) {
    %c0_i32 = arith.constant 0 : i32
    return %arg1, %arg2 : i32, i32
  }
  func.func @transform_2(%arg0: i32, %arg1: i32, %arg2: i32) -> (i32, i32) {
    %c0_i32 = arith.constant 0 : i32
    %c0_i32_0 = arith.constant 0 : i32
    return %arg0, %c0_i32 : i32, i32
  }
  func.func @transform_3(%arg0: i32, %arg1: i32, %arg2: i32) -> (i32, i32) {
    %c0_i32 = arith.constant 0 : i32
    %c0_i32_0 = arith.constant 0 : i32
    return %c0_i32, %arg1 : i32, i32
  }
  func.func @transform_4(%arg0: i32, %arg1: i32, %arg2: i32) -> (i32, i32) {
    %c0_i32 = arith.constant 0 : i32
    return %arg0, %arg1 : i32, i32
  }
}

</mosaic_0001>

<llo_original>
// kernel: tpu_custom_call.1
$region0: #{tpu_custom_call.1}
  #allocation0 [shape = 'u32[]', space=smem, size = 0x4, offset = 0x4, fixed_abs, tag = 'smem constant byte address 0x4 - core index']
  #allocation1 [shape = 'u32[144,128]{1,0:T(1,128)}', space=vmem, size = 0x12000, scoped, tag = 'internal scratch']
  #allocation2 [shape = 'f32[128,128]{1,0:T(8,128)}', space=vmem, size = 0x10000, scoped, tag = 'scratch operand']
  %s0 = inlined_call_operand.vmem [shape: f32[128,32], index: 0, kind: input, shape index: {}]
  %s1 = inlined_call_operand.vmem [shape: f32[128,32], index: 1, kind: input, shape index: {}]
  %s2 = inlined_call_operand.vmem [shape: f32[128,1], index: 2, kind: input, shape index: {}]
  %s3 = inlined_call_operand.vmem [shape: f32[1,128], index: 3, kind: input, shape index: {}]
  %s4 = inlined_call_operand.hbm [shape: f32[128,128], index: 4, kind: output, shape index: {}]
  %s5 = sld [smem:[#allocation0]]
  $region34: #{tpu_custom_call.1} parent=0
    _
  %s7 = ssub.s32 1, %s5
  %s8 = scalar_select 0, %s7, %s5
  $region1: #{tpu_custom_call.1} parent=0
    #allocation3 [shape = 'u8[65536]{0}', space=vmem, size = 0x10000, scoped, tag = 'output window, operand 0, single buffered']
    #allocation4 [shape = 's32[1]{0}', space=sflag, size = 0x4, scoped, tag = 'scoped memory for tpu_custom_call.1']
    %9 = vsyncpa [#allocation4], 0
    // Predicated region
    $region2: #{tpu_custom_call.1} parent=1 // pred_check
      _
    $region3: #{tpu_custom_call.1} parent=1 // pred_check_branch
      %11 = sbr.rel (0) target = $region5
    $region4: #{tpu_custom_call.1} parent=1 // pred_region
      _
    $region5: #{tpu_custom_call.1} parent=1 // pred_fallthru
      _
    // Predicated region
    $region6: #{tpu_custom_call.1} parent=1 // pred_check
      _
    $region7: #{tpu_custom_call.1} parent=1 // pred_check_branch
      %13 = sbr.rel (0) target = $region9
    $region8: #{tpu_custom_call.1} parent=1 // pred_region
      _
    $region9: #{tpu_custom_call.1} parent=1 // pred_fallthru
      _
    // Predicated region
    $region10: #{tpu_custom_call.1} parent=1 // pred_check
      _
    $region11: #{tpu_custom_call.1} parent=1 // pred_check_branch
      %15 = sbr.rel (0) target = $region13
    $region12: #{tpu_custom_call.1} parent=1 // pred_region
      _
    $region13: #{tpu_custom_call.1} parent=1 // pred_fallthru
      _
    // Predicated region
    $region14: #{tpu_custom_call.1} parent=1 // pred_check
      _
    $region15: #{tpu_custom_call.1} parent=1 // pred_check_branch
      %17 = sbr.rel (0) target = $region17
    $region16: #{tpu_custom_call.1} parent=1 // pred_region
      _
    $region17: #{tpu_custom_call.1} parent=1 // pred_fallthru
      _
    %p18 = scmp.eq.s32.totalorder 0, 0
    // Predicated region
    $region18: #{tpu_custom_call.1} parent=1 // pred_check
      %p19 = pneg %p18
    $region19: #{tpu_custom_call.1} parent=1 // pred_check_branch
      %21 = sbr.rel (%p19) target = $region21
    $region20: #{tpu_custom_call.1} parent=1 // pred_region
      %22 = vst [vmem:[#allocation2] sm:$0xff] 0.0
      %23 = vst [vmem:[#allocation2 + $0x8] sm:$0xff] 0.0
      %24 = vst [vmem:[#allocation2 + $0x10] sm:$0xff] 0.0
      %25 = vst [vmem:[#allocation2 + $0x18] sm:$0xff] 0.0
      %26 = vst [vmem:[#allocation2 + $0x20] sm:$0xff] 0.0
      %27 = vst [vmem:[#allocation2 + $0x28] sm:$0xff] 0.0
      %28 = vst [vmem:[#allocation2 + $0x30] sm:$0xff] 0.0
      %29 = vst [vmem:[#allocation2 + $0x38] sm:$0xff] 0.0
      %30 = vst [vmem:[#allocation2 + $0x40] sm:$0xff] 0.0
      %31 = vst [vmem:[#allocation2 + $0x48] sm:$0xff] 0.0
      %32 = vst [vmem:[#allocation2 + $0x50] sm:$0xff] 0.0
      %33 = vst [vmem:[#allocation2 + $0x58] sm:$0xff] 0.0
      %34 = vst [vmem:[#allocation2 + $0x60] sm:$0xff] 0.0
      %35 = vst [vmem:[#allocation2 + $0x68] sm:$0xff] 0.0
      %36 = vst [vmem:[#allocation2 + $0x70] sm:$0xff] 0.0
      %37 = vst [vmem:[#allocation2 + $0x78] sm:$0xff] 0.0
    $region21: #{tpu_custom_call.1} parent=1 // pred_fallthru
      _
    %v38 = vld [vmem:[%s0] sm:$0xff]
    %v39 = vld [vmem:[%s0 + $0x8] sm:$0xff]
    %v40 = vld [vmem:[%s0 + $0x10] sm:$0xff]
    %v41 = vld [vmem:[%s0 + $0x18] sm:$0xff]
    %v42 = vld [vmem:[%s0 + $0x20] sm:$0xff]
    %v43 = vld [vmem:[%s0 + $0x28] sm:$0xff]
    %v44 = vld [vmem:[%s0 + $0x30] sm:$0xff]
    %v45 = vld [vmem:[%s0 + $0x38] sm:$0xff]
    %v46 = vld [vmem:[%s0 + $0x40] sm:$0xff]
    %v47 = vld [vmem:[%s0 + $0x48] sm:$0xff]
    %v48 = vld [vmem:[%s0 + $0x50] sm:$0xff]
    %v49 = vld [vmem:[%s0 + $0x58] sm:$0xff]
    %v50 = vld [vmem:[%s0 + $0x60] sm:$0xff]
    %v51 = vld [vmem:[%s0 + $0x68] sm:$0xff]
    %v52 = vld [vmem:[%s0 + $0x70] sm:$0xff]
    %v53 = vld [vmem:[%s0 + $0x78] sm:$0xff]
    %v54 = vmul.f32 %v38, 0.01
    %v55 = vmul.f32 %v39, 0.01
    %v56 = vmul.f32 %v40, 0.01
    %v57 = vmul.f32 %v41, 0.01
    %v58 = vmul.f32 %v42, 0.01
    %v59 = vmul.f32 %v43, 0.01
    %v60 = vmul.f32 %v44, 0.01
    %v61 = vmul.f32 %v45, 0.01
    %v62 = vmul.f32 %v46, 0.01
    %v63 = vmul.f32 %v47, 0.01
    %v64 = vmul.f32 %v48, 0.01
    %v65 = vmul.f32 %v49, 0.01
    %v66 = vmul.f32 %v50, 0.01
    %v67 = vmul.f32 %v51, 0.01
    %v68 = vmul.f32 %v52, 0.01
    %v69 = vmul.f32 %v53, 0.01
    %v70 = vld [vmem:[%s1] sm:$0xff]
    %v71 = vld [vmem:[%s1 + $0x8] sm:$0xff]
    %v72 = vld [vmem:[%s1 + $0x10] sm:$0xff]
    %v73 = vld [vmem:[%s1 + $0x18] sm:$0xff]
    %v74 = vld [vmem:[%s1 + $0x20] sm:$0xff]
    %v75 = vld [vmem:[%s1 + $0x28] sm:$0xff]
    %v76 = vld [vmem:[%s1 + $0x30] sm:$0xff]
    %v77 = vld [vmem:[%s1 + $0x38] sm:$0xff]
    %v78 = vld [vmem:[%s1 + $0x40] sm:$0xff]
    %v79 = vld [vmem:[%s1 + $0x48] sm:$0xff]
    %v80 = vld [vmem:[%s1 + $0x50] sm:$0xff]
    %v81 = vld [vmem:[%s1 + $0x58] sm:$0xff]
    %v82 = vld [vmem:[%s1 + $0x60] sm:$0xff]
    %v83 = vld [vmem:[%s1 + $0x68] sm:$0xff]
    %v84 = vld [vmem:[%s1 + $0x70] sm:$0xff]
    %v85 = vld [vmem:[%s1 + $0x78] sm:$0xff]
    %v86 = vld [vmem:[#allocation2] sm:$0xff]
    %v87 = vld [vmem:[#allocation2 + $0x8] sm:$0xff]
    %v88 = vld [vmem:[#allocation2 + $0x10] sm:$0xff]
    %v89 = vld [vmem:[#allocation2 + $0x18] sm:$0xff]
    %v90 = vld [vmem:[#allocation2 + $0x20] sm:$0xff]
    %v91 = vld [vmem:[#allocation2 + $0x28] sm:$0xff]
    %v92 = vld [vmem:[#allocation2 + $0x30] sm:$0xff]
    %v93 = vld [vmem:[#allocation2 + $0x38] sm:$0xff]
    %v94 = vld [vmem:[#allocation2 + $0x40] sm:$0xff]
    %v95 = vld [vmem:[#allocation2 + $0x48] sm:$0xff]
    %v96 = vld [vmem:[#allocation2 + $0x50] sm:$0xff]
    %v97 = vld [vmem:[#allocation2 + $0x58] sm:$0xff]
    %v98 = vld [vmem:[#allocation2 + $0x60] sm:$0xff]
    %v99 = vld [vmem:[#allocation2 + $0x68] sm:$0xff]
    %v100 = vld [vmem:[#allocation2 + $0x70] sm:$0xff]
    %v101 = vld [vmem:[#allocation2 + $0x78] sm:$0xff]
    %vm102 = vcmask 261120
    %v104 = vsel %vm102, %v54, 0
    %v107 = vsel %vm102, %v55, 0
    %v110 = vsel %vm102, %v56, 0
    %v113 = vsel %vm102, %v57, 0
    %v116 = vsel %vm102, %v58, 0
    %v119 = vsel %vm102, %v59, 0
    %v122 = vsel %vm102, %v60, 0
    %v125 = vsel %vm102, %v61, 0
    %v128 = vsel %vm102, %v62, 0
    %v131 = vsel %vm102, %v63, 0
    %v134 = vsel %vm102, %v64, 0
    %v137 = vsel %vm102, %v65, 0
    %v140 = vsel %vm102, %v66, 0
    %v143 = vsel %vm102, %v67, 0
    %v146 = vsel %vm102, %v68, 0
    %v149 = vsel %vm102, %v69, 0
    %v152 = vsel %vm102, %v70, 0
    %v155 = vsel %vm102, %v71, 0
    %v158 = vsel %vm102, %v72, 0
    %v161 = vsel %vm102, %v73, 0
    %v164 = vsel %vm102, %v74, 0
    %v167 = vsel %vm102, %v75, 0
    %v170 = vsel %vm102, %v76, 0
    %v173 = vsel %vm102, %v77, 0
    %v176 = vsel %vm102, %v78, 0
    %v179 = vsel %vm102, %v79, 0
    %v182 = vsel %vm102, %v80, 0
    %v185 = vsel %vm102, %v81, 0
    %v188 = vsel %vm102, %v82, 0
    %v191 = vsel %vm102, %v83, 0
    %v194 = vsel %vm102, %v84, 0
    %v197 = vsel %vm102, %v85, 0
    %199 = vmatprep.subr.mxu0 0.0
    %200 = vmatpush1.xpose.msra.mxu0 %v152
    %201 = vmatprep.subr.mxu0 0.0
    %202 = vmatpush1.xpose.msra.mxu0 %v155
    %203 = vmatprep.subr.mxu0 0.0
    %204 = vmatpush1.xpose.msra.mxu0 %v158
    %205 = vmatprep.subr.mxu0 0.0
    %206 = vmatpush1.xpose.msra.mxu0 %v161
    %207 = vmatprep.subr.mxu0 0.0
    %208 = vmatpush1.xpose.msra.mxu0 %v164
    %209 = vmatprep.subr.mxu0 0.0
    %210 = vmatpush1.xpose.msra.mxu0 %v167
    %211 = vmatprep.subr.mxu0 0.0
    %212 = vmatpush1.xpose.msra.mxu0 %v170
    %213 = vmatprep.subr.mxu0 0.0
    %214 = vmatpush1.xpose.msra.mxu0 %v173
    %215 = vmatprep.subr.mxu0 0.0
    %216 = vmatpush1.xpose.msra.mxu0 %v176
    %217 = vmatprep.subr.mxu0 0.0
    %218 = vmatpush1.xpose.msra.mxu0 %v179
    %219 = vmatprep.subr.mxu0 0.0
    %220 = vmatpush1.xpose.msra.mxu0 %v182
    %221 = vmatprep.subr.mxu0 0.0
    %222 = vmatpush1.xpose.msra.mxu0 %v185
    %223 = vmatprep.subr.mxu0 0.0
    %224 = vmatpush1.xpose.msra.mxu0 %v188
    %225 = vmatprep.subr.mxu0 0.0
    %226 = vmatpush1.xpose.msra.mxu0 %v191
    %227 = vmatprep.subr.mxu0 0.0
    %228 = vmatpush1.xpose.msra.mxu0 %v194
    %229 = vmatprep.subr.mxu0 0.0
    %230 = vmatpush1.xpose.msra.mxu0 %v197
    %231 = vmatprep.subr.mxu0 0.0
    %232 = vmatpush1.xpose.msra.mxu0 0.0
    %233 = vmatprep.subr.mxu0 0.0
    %234 = vmatpush1.xpose.msra.mxu0 0.0
    %235 = vmatprep.subr.mxu0 0.0
    %236 = vmatpush1.xpose.msra.mxu0 0.0
    %237 = vmatprep.subr.mxu0 0.0
    %238 = vmatpush1.xpose.msra.mxu0 0.0
    %239 = vmatprep.subr.mxu0 0.0
    %240 = vmatpush1.xpose.msra.mxu0 0.0
    %241 = vmatprep.subr.mxu0 0.0
    %242 = vmatpush1.xpose.msra.mxu0 0.0
    %243 = vmatprep.subr.mxu0 0.0
    %244 = vmatpush1.xpose.msra.mxu0 0.0
    %245 = vmatprep.subr.mxu0 0.0
    %246 = vmatpush1.xpose.msra.mxu0 0.0
    %247 = vmatprep.subr.mxu0 0.0
    %248 = vmatpush1.xpose.msra.mxu0 0.0
    %249 = vmatprep.subr.mxu0 0.0
    %250 = vmatpush1.xpose.msra.mxu0 0.0
    %251 = vmatprep.subr.mxu0 0.0
    %252 = vmatpush1.xpose.msra.mxu0 0.0
    %253 = vmatprep.subr.mxu0 0.0
    %254 = vmatpush1.xpose.msra.mxu0 0.0
    %255 = vmatprep.subr.mxu0 0.0
    %256 = vmatpush1.xpose.msra.mxu0 0.0
    %257 = vmatprep.subr.mxu0 0.0
    %258 = vmatpush1.xpose.msra.mxu0 0.0
    %259 = vmatprep.subr.mxu0 0.0
    %260 = vmatpush1.xpose.msra.mxu0 0.0
    %261 = vmatprep.subr.mxu0 0.0
    %262 = vmatpush1.xpose.msra.mxu0 0.0
    %263 = vmatprep.mubr.f32.mxu0 0.0
    %264 = vmatmul.mubr.f32.gmra.mrb[0].mxu0 %v104
    %v265 = vpop.f32.mrb[0].mxu0
    %v266 = vadd.f32 0.0, %v265
    %v267 = vpop.f32.mrb[0].mxu0
    %268 = vmatprep.mubr.f32.mxu0 0.0
    %269 = vmatmul.mubr.f32.gmra.mrb[0].mxu0 %v107
    %v270 = vpop.f32.mrb[0].mxu0
    %v271 = vadd.f32 0.0, %v270
    %v272 = vpop.f32.mrb[0].mxu0
    %273 = vmatprep.mubr.f32.mxu0 0.0
    %274 = vmatmul.mubr.f32.gmra.mrb[0].mxu0 %v110
    %v275 = vpop.f32.mrb[0].mxu0
    %v276 = vadd.f32 0.0, %v275
    %v277 = vpop.f32.mrb[0].mxu0
    %278 = vmatprep.mubr.f32.mxu0 0.0
    %279 = vmatmul.mubr.f32.gmra.mrb[0].mxu0 %v113
    %v280 = vpop.f32.mrb[0].mxu0
    %v281 = vadd.f32 0.0, %v280
    %v282 = vpop.f32.mrb[0].mxu0
    %283 = vmatprep.mubr.f32.mxu0 0.0
    %284 = vmatmul.mubr.f32.gmra.mrb[0].mxu0 %v116
    %v285 = vpop.f32.mrb[0].mxu0
    %v286 = vadd.f32 0.0, %v285
    %v287 = vpop.f32.mrb[0].mxu0
    %288 = vmatprep.mubr.f32.mxu0 0.0
    %289 = vmatmul.mubr.f32.gmra.mrb[0].mxu0 %v119
    %v290 = vpop.f32.mrb[0].mxu0
    %v291 = vadd.f32 0.0, %v290
    %v292 = vpop.f32.mrb[0].mxu0
    %293 = vmatprep.mubr.f32.mxu0 0.0
    %294 = vmatmul.mubr.f32.gmra.mrb[0].mxu0 %v122
    %v295 = vpop.f32.mrb[0].mxu0
    %v296 = vadd.f32 0.0, %v295
    %v297 = vpop.f32.mrb[0].mxu0
    %298 = vmatprep.mubr.f32.mxu0 0.0
    %299 = vmatmul.mubr.f32.gmra.mrb[0].mxu0 %v125
    %v300 = vpop.f32.mrb[0].mxu0
    %v301 = vadd.f32 0.0, %v300
    %v302 = vpop.f32.mrb[0].mxu0
    %303 = vmatprep.mubr.f32.mxu0 0.0
    %304 = vmatmul.mubr.f32.gmra.mrb[0].mxu0 %v128
    %v305 = vpop.f32.mrb[0].mxu0
    %v306 = vadd.f32 0.0, %v305
    %v307 = vpop.f32.mrb[0].mxu0
    %308 = vmatprep.mubr.f32.mxu0 0.0
    %309 = vmatmul.mubr.f32.gmra.mrb[0].mxu0 %v131
    %v310 = vpop.f32.mrb[0].mxu0
    %v311 = vadd.f32 0.0, %v310
    %v312 = vpop.f32.mrb[0].mxu0
    %313 = vmatprep.mubr.f32.mxu0 0.0
    %314 = vmatmul.mubr.f32.gmra.mrb[0].mxu0 %v134
    %v315 = vpop.f32.mrb[0].mxu0
    %v316 = vadd.f32 0.0, %v315
    %v317 = vpop.f32.mrb[0].mxu0
    %318 = vmatprep.mubr.f32.mxu0 0.0
    %319 = vmatmul.mubr.f32.gmra.mrb[0].mxu0 %v137
    %v320 = vpop.f32.mrb[0].mxu0
    %v321 = vadd.f32 0.0, %v320
    %v322 = vpop.f32.mrb[0].mxu0
    %323 = vmatprep.mubr.f32.mxu0 0.0
    %324 = vmatmul.mubr.f32.gmra.mrb[0].mxu0 %v140
    %v325 = vpop.f32.mrb[0].mxu0
    %v326 = vadd.f32 0.0, %v325
    %v327 = vpop.f32.mrb[0].mxu0
    %328 = vmatprep.mubr.f32.mxu0 0.0
    %329 = vmatmul.mubr.f32.gmra.mrb[0].mxu0 %v143
    %v330 = vpop.f32.mrb[0].mxu0
    %v331 = vadd.f32 0.0, %v330
    %v332 = vpop.f32.mrb[0].mxu0
    %333 = vmatprep.mubr.f32.mxu0 0.0
    %334 = vmatmul.mubr.f32.gmra.mrb[0].mxu0 %v146
    %v335 = vpop.f32.mrb[0].mxu0
    %v336 = vadd.f32 0.0, %v335
    %v337 = vpop.f32.mrb[0].mxu0
    %338 = vmatprep.mubr.f32.mxu0 0.0
    %339 = vmatmul.mubr.f32.gmra.mrb[0].mxu0 %v149
    %v340 = vpop.f32.mrb[0].mxu0
    %v341 = vadd.f32 0.0, %v340
    %v342 = vpop.f32.mrb[0].mxu0
    %343 = vdwg.mxu0
    %v344 = vadd.f32 %v86, %v266
    %v345 = vadd.f32 %v87, %v271
    %v346 = vadd.f32 %v88, %v276
    %v347 = vadd.f32 %v89, %v281
    %v348 = vadd.f32 %v90, %v286
    %v349 = vadd.f32 %v91, %v291
    %v350 = vadd.f32 %v92, %v296
    %v351 = vadd.f32 %v93, %v301
    %v352 = vadd.f32 %v94, %v306
    %v353 = vadd.f32 %v95, %v311
    %v354 = vadd.f32 %v96, %v316
    %v355 = vadd.f32 %v97, %v321
    %v356 = vadd.f32 %v98, %v326
    %v357 = vadd.f32 %v99, %v331
    %v358 = vadd.f32 %v100, %v336
    %v359 = vadd.f32 %v101, %v341
    %360 = vst [vmem:[#allocation2] sm:$0xff] %v344
    %361 = vst [vmem:[#allocation2 + $0x8] sm:$0xff] %v345
    %362 = vst [vmem:[#allocation2 + $0x10] sm:$0xff] %v346
    %363 = vst [vmem:[#allocation2 + $0x18] sm:$0xff] %v347
    %364 = vst [vmem:[#allocation2 + $0x20] sm:$0xff] %v348
    %365 = vst [vmem:[#allocation2 + $0x28] sm:$0xff] %v349
    %366 = vst [vmem:[#allocation2 + $0x30] sm:$0xff] %v350
    %367 = vst [vmem:[#allocation2 + $0x38] sm:$0xff] %v351
    %368 = vst [vmem:[#allocation2 + $0x40] sm:$0xff] %v352
    %369 = vst [vmem:[#allocation2 + $0x48] sm:$0xff] %v353
    %370 = vst [vmem:[#allocation2 + $0x50] sm:$0xff] %v354
    %371 = vst [vmem:[#allocation2 + $0x58] sm:$0xff] %v355
    %372 = vst [vmem:[#allocation2 + $0x60] sm:$0xff] %v356
    %373 = vst [vmem:[#allocation2 + $0x68] sm:$0xff] %v357
    %374 = vst [vmem:[#allocation2 + $0x70] sm:$0xff] %v358
    %375 = vst [vmem:[#allocation2 + $0x78] sm:$0xff] %v359
    // Predicated region
    $region22: #{tpu_custom_call.1} parent=1 // pred_check
      %p376 = pneg %p18
    $region23: #{tpu_custom_call.1} parent=1 // pred_check_branch
      %378 = sbr.rel (%p376) target = $region25
    $region24: #{tpu_custom_call.1} parent=1 // pred_region
      %v379 = vld [vmem:[%s2] sm:$0xff]
      %v380 = vld [vmem:[%s2 + $0x8] sm:$0xff]
      %v381 = vld [vmem:[%s2 + $0x10] sm:$0xff]
      %v382 = vld [vmem:[%s2 + $0x18] sm:$0xff]
      %v383 = vld [vmem:[%s2 + $0x20] sm:$0xff]
      %v384 = vld [vmem:[%s2 + $0x28] sm:$0xff]
      %v385 = vld [vmem:[%s2 + $0x30] sm:$0xff]
      %v386 = vld [vmem:[%s2 + $0x38] sm:$0xff]
      %v387 = vld [vmem:[%s2 + $0x40] sm:$0xff]
      %v388 = vld [vmem:[%s2 + $0x48] sm:$0xff]
      %v389 = vld [vmem:[%s2 + $0x50] sm:$0xff]
      %v390 = vld [vmem:[%s2 + $0x58] sm:$0xff]
      %v391 = vld [vmem:[%s2 + $0x60] sm:$0xff]
      %v392 = vld [vmem:[%s2 + $0x68] sm:$0xff]
      %v393 = vld [vmem:[%s2 + $0x70] sm:$0xff]
      %v394 = vld [vmem:[%s2 + $0x78] sm:$0xff]
      %v395 = vld [vmem:[#allocation2] sm:$0xff]
      %v396 = vld [vmem:[#allocation2 + $0x8] sm:$0xff]
      %v397 = vld [vmem:[#allocation2 + $0x10] sm:$0xff]
      %v398 = vld [vmem:[#allocation2 + $0x18] sm:$0xff]
      %v399 = vld [vmem:[#allocation2 + $0x20] sm:$0xff]
      %v400 = vld [vmem:[#allocation2 + $0x28] sm:$0xff]
      %v401 = vld [vmem:[#allocation2 + $0x30] sm:$0xff]
      %v402 = vld [vmem:[#allocation2 + $0x38] sm:$0xff]
      %v403 = vld [vmem:[#allocation2 + $0x40] sm:$0xff]
      %v404 = vld [vmem:[#allocation2 + $0x48] sm:$0xff]
      %v405 = vld [vmem:[#allocation2 + $0x50] sm:$0xff]
      %v406 = vld [vmem:[#allocation2 + $0x58] sm:$0xff]
      %v407 = vld [vmem:[#allocation2 + $0x60] sm:$0xff]
      %v408 = vld [vmem:[#allocation2 + $0x68] sm:$0xff]
      %v409 = vld [vmem:[#allocation2 + $0x70] sm:$0xff]
      %v410 = vld [vmem:[#allocation2 + $0x78] sm:$0xff]
      %412 = vset.pattern.permute.xlu0 0
      %413 = vperm.xlu0 %412, %v379
      %v414 = vpop.permute.xlu0 %413
      %417 = vset.pattern.permute.xlu0 0
      %418 = vperm.xlu0 %417, %v380
      %v419 = vpop.permute.xlu0 %418
      %422 = vset.pattern.permute.xlu0 0
      %423 = vperm.xlu0 %422, %v381
      %v424 = vpop.permute.xlu0 %423
      %427 = vset.pattern.permute.xlu0 0
      %428 = vperm.xlu0 %427, %v382
      %v429 = vpop.permute.xlu0 %428
      %432 = vset.pattern.permute.xlu0 0
      %433 = vperm.xlu0 %432, %v383
      %v434 = vpop.permute.xlu0 %433
      %437 = vset.pattern.permute.xlu0 0
      %438 = vperm.xlu0 %437, %v384
      %v439 = vpop.permute.xlu0 %438
      %442 = vset.pattern.permute.xlu0 0
      %443 = vperm.xlu0 %442, %v385
      %v444 = vpop.permute.xlu0 %443
      %447 = vset.pattern.permute.xlu0 0
      %448 = vperm.xlu0 %447, %v386
      %v449 = vpop.permute.xlu0 %448
      %452 = vset.pattern.permute.xlu0 0
      %453 = vperm.xlu0 %452, %v387
      %v454 = vpop.permute.xlu0 %453
      %457 = vset.pattern.permute.xlu0 0
      %458 = vperm.xlu0 %457, %v388
      %v459 = vpop.permute.xlu0 %458
      %462 = vset.pattern.permute.xlu0 0
      %463 = vperm.xlu0 %462, %v389
      %v464 = vpop.permute.xlu0 %463
      %467 = vset.pattern.permute.xlu0 0
      %468 = vperm.xlu0 %467, %v390
      %v469 = vpop.permute.xlu0 %468
      %472 = vset.pattern.permute.xlu0 0
      %473 = vperm.xlu0 %472, %v391
      %v474 = vpop.permute.xlu0 %473
      %477 = vset.pattern.permute.xlu0 0
      %478 = vperm.xlu0 %477, %v392
      %v479 = vpop.permute.xlu0 %478
      %482 = vset.pattern.permute.xlu0 0
      %483 = vperm.xlu0 %482, %v393
      %v484 = vpop.permute.xlu0 %483
      %487 = vset.pattern.permute.xlu0 0
      %488 = vperm.xlu0 %487, %v394
      %v489 = vpop.permute.xlu0 %488
      %v491 = vadd.f32 %v414, %v395
      %v492 = vadd.f32 %v419, %v396
      %v493 = vadd.f32 %v424, %v397
      %v494 = vadd.f32 %v429, %v398
      %v495 = vadd.f32 %v434, %v399
      %v496 = vadd.f32 %v439, %v400
      %v497 = vadd.f32 %v444, %v401
      %v498 = vadd.f32 %v449, %v402
      %v499 = vadd.f32 %v454, %v403
      %v500 = vadd.f32 %v459, %v404
      %v501 = vadd.f32 %v464, %v405
      %v502 = vadd.f32 %v469, %v406
      %v503 = vadd.f32 %v474, %v407
      %v504 = vadd.f32 %v479, %v408
      %v505 = vadd.f32 %v484, %v409
      %v506 = vadd.f32 %v489, %v410
      %v507 = vld [vmem:[%s3] sm:$0x1]
      %v509 = vlaneseq
      %v510 = vshrl.u32 %v509, 7
      %v511 = vsub.s32 0, %v510
      %v512 = vrot.slane %v507, %v511
      %v514 = vadd.f32 %v491, %v512
      %v515 = vadd.f32 %v492, %v512
      %v516 = vadd.f32 %v493, %v512
      %v517 = vadd.f32 %v494, %v512
      %v518 = vadd.f32 %v495, %v512
      %v519 = vadd.f32 %v496, %v512
      %v520 = vadd.f32 %v497, %v512
      %v521 = vadd.f32 %v498, %v512
      %v522 = vadd.f32 %v499, %v512
      %v523 = vadd.f32 %v500, %v512
      %v524 = vadd.f32 %v501, %v512
      %v525 = vadd.f32 %v502, %v512
      %v526 = vadd.f32 %v503, %v512
      %v527 = vadd.f32 %v504, %v512
      %v528 = vadd.f32 %v505, %v512
      %v529 = vadd.f32 %v506, %v512
      %v530 = vmin.f32 %v514, 0.0
      %v531 = vmin.f32 %v515, 0.0
      %v532 = vmin.f32 %v516, 0.0
      %v533 = vmin.f32 %v517, 0.0
      %v534 = vmin.f32 %v518, 0.0
      %v535 = vmin.f32 %v519, 0.0
      %v536 = vmin.f32 %v520, 0.0
      %v537 = vmin.f32 %v521, 0.0
      %v538 = vmin.f32 %v522, 0.0
      %v539 = vmin.f32 %v523, 0.0
      %v540 = vmin.f32 %v524, 0.0
      %v541 = vmin.f32 %v525, 0.0
      %v542 = vmin.f32 %v526, 0.0
      %v543 = vmin.f32 %v527, 0.0
      %v544 = vmin.f32 %v528, 0.0
      %v545 = vmin.f32 %v529, 0.0
      %v546 = vmul.f32 %v530, 1.442695
      %v547 = vpow.pop %v546
      %v548 = vmul.f32 %v531, 1.442695
      %v549 = vpow.pop %v548
      %v550 = vmul.f32 %v532, 1.442695
      %v551 = vpow.pop %v550
      %v552 = vmul.f32 %v533, 1.442695
      %v553 = vpow.pop %v552
      %v554 = vmul.f32 %v534, 1.442695
      %v555 = vpow.pop %v554
      %v556 = vmul.f32 %v535, 1.442695
      %v557 = vpow.pop %v556
      %v558 = vmul.f32 %v536, 1.442695
      %v559 = vpow.pop %v558
      %v560 = vmul.f32 %v537, 1.442695
      %v561 = vpow.pop %v560
      %v562 = vmul.f32 %v538, 1.442695
      %v563 = vpow.pop %v562
      %v564 = vmul.f32 %v539, 1.442695
      %v565 = vpow.pop %v564
      %v566 = vmul.f32 %v540, 1.442695
      %v567 = vpow.pop %v566
      %v568 = vmul.f32 %v541, 1.442695
      %v569 = vpow.pop %v568
      %v570 = vmul.f32 %v542, 1.442695
      %v571 = vpow.pop %v570
      %v572 = vmul.f32 %v543, 1.442695
      %v573 = vpow.pop %v572
      %v574 = vmul.f32 %v544, 1.442695
      %v575 = vpow.pop %v574
      %v576 = vmul.f32 %v545, 1.442695
      %v577 = vpow.pop %v576
      %578 = vst [vmem:[#allocation3] sm:$0xff] %v547
      %579 = vst [vmem:[#allocation3 + $0x8] sm:$0xff] %v549
      %580 = vst [vmem:[#allocation3 + $0x10] sm:$0xff] %v551
      %581 = vst [vmem:[#allocation3 + $0x18] sm:$0xff] %v553
      %582 = vst [vmem:[#allocation3 + $0x20] sm:$0xff] %v555
      %583 = vst [vmem:[#allocation3 + $0x28] sm:$0xff] %v557
      %584 = vst [vmem:[#allocation3 + $0x30] sm:$0xff] %v559
      %585 = vst [vmem:[#allocation3 + $0x38] sm:$0xff] %v561
      %586 = vst [vmem:[#allocation3 + $0x40] sm:$0xff] %v563
      %587 = vst [vmem:[#allocation3 + $0x48] sm:$0xff] %v565
      %588 = vst [vmem:[#allocation3 + $0x50] sm:$0xff] %v567
      %589 = vst [vmem:[#allocation3 + $0x58] sm:$0xff] %v569
      %590 = vst [vmem:[#allocation3 + $0x60] sm:$0xff] %v571
      %591 = vst [vmem:[#allocation3 + $0x68] sm:$0xff] %v573
      %592 = vst [vmem:[#allocation3 + $0x70] sm:$0xff] %v575
      %593 = vst [vmem:[#allocation3 + $0x78] sm:$0xff] %v577
    $region25: #{tpu_custom_call.1} parent=1 // pred_fallthru
      _
    // Predicated region
    $region26: #{tpu_custom_call.1} parent=1 // pred_check
      _
    $region27: #{tpu_custom_call.1} parent=1 // pred_check_branch
      %595 = sbr.rel (0) target = $region29
    $region28: #{tpu_custom_call.1} parent=1 // pred_region
      %s597 = ssub.s32 2048, 2048
      %598 = vsyncadd [#allocation4], %s597
      %s599 = sshll.u32 [#allocation3], 4
      %s600 = int_to_ptr.vmem [resolvable:$true] %s599
      %605 = dma.vmem_to_hbm [thread:$0]  %s600, 2048, %s4, [#allocation4], 128, 128, 8
    $region29: #{tpu_custom_call.1} parent=1 // pred_fallthru
      _
    // Predicated region
    $region30: #{tpu_custom_call.1} parent=1 // pred_check
      _
    $region31: #{tpu_custom_call.1} parent=1 // pred_check_branch
      %607 = sbr.rel (0) target = $region33
    $region32: #{tpu_custom_call.1} parent=1 // pred_region
      %608 = dma.done [#allocation4], 2048
    $region33: #{tpu_custom_call.1} parent=1 // pred_fallthru
      _
    %609 = vsyncpa [#allocation4], 1

</llo_original>
